<compile_context>
chip_gen: v6e
topology: v6e:2x2x1
jax: 0.10.0
libtpu: 0.0.40
codegen_flags: <defaults>
</compile_context>

<pallas_src>
import functools

import jax
import jax.numpy as jnp
from jax.experimental import pallas as pl
from jax.experimental.pallas import tpu as pltpu


def _round_up(x, m):
    return ((x + m - 1) // m) * m


def _make_mlp_kernel(compute_dtype):
    """compute_dtype=None -> matmuls in input dtype (f32); else cast operands
    (e.g. bf16).  Accumulation is always f32; bias/ReLU always f32 VPU."""

    def _mlp_kernel(x_ref, w1_ref, b1_ref, w2_ref, b2_ref, o_ref):
        x = x_ref[...]
        w1 = w1_ref[...]
        w2 = w2_ref[...]
        if compute_dtype is not None:
            x = x.astype(compute_dtype)
            w1 = w1.astype(compute_dtype)
            w2 = w2.astype(compute_dtype)

        # fc1: MXU matmul with f32 accumulation; bias + ReLU stay in f32 (VPU).
        h = jnp.dot(x, w1, preferred_element_type=jnp.float32)
        h = jnp.maximum(h + b1_ref[...], 0.0)

        # fc2: cast only at the MXU boundary; f32 accumulation + f32 bias add.
        h = h.astype(w2.dtype)
        out = jnp.dot(h, w2, preferred_element_type=jnp.float32) + b2_ref[...]
        o_ref[...] = out.astype(o_ref.dtype)

    return _mlp_kernel


@functools.partial(jax.jit, static_argnames=("b_tile", "compute_dtype"))
def multiple_parameters_forward(x, w1_t, b1, w2_t, b2, *, b_tile=4096,
                                compute_dtype=None):
    """x: (B, input_size); w1_t: (input_size, hidden); w2_t: (hidden, classes).

    Weights are stored pre-transposed as (in_features, out_features).
    """
    B, in_features = x.shape
    hidden = w1_t.shape[1]
    num_classes = w2_t.shape[1]
    itemsize = jnp.dtype(x.dtype).itemsize

    # --- lane-dense hidden: zero-pad hidden axis to a multiple of 128 --------
    # (tiny one-time pad on the weights only; never touches the big x array)
    h_pad = _round_up(hidden, 128)
    if h_pad != hidden:
        w1_t = jnp.pad(w1_t, ((0, 0), (0, h_pad - hidden)))
        b1 = jnp.pad(b1, (0, h_pad - hidden))
        w2_t = jnp.pad(w2_t, ((0, h_pad - hidden), (0, 0)))

    b1_2d = b1.reshape(1, h_pad)
    b2_2d = b2.reshape(1, num_classes)

    # --- batch tiling: fat tiles, no wrapper-side pad -------------------------
    # Round any user tile up to a multiple of 8 (sublane constraint) and cap at B.
    b_tile = _round_up(max(8, min(b_tile, B)), 8)
    n_steps = pl.cdiv(B, b_tile)
    # v7x has 2 TensorCores: keep >= 4 "parallel" steps when the batch is large
    # enough to split usefully (measured no-op on single-core v5e/v6e).
    if n_steps < 4 and B >= 4 * 256:
        b_tile = _round_up(pl.cdiv(B, 4), 8)
        n_steps = pl.cdiv(B, b_tile)

    # --- VMEM budget derived from the tile ------------------------------------
    vmem_bytes = (
        2 * b_tile * (in_features + num_classes) * itemsize   # x/out double-buffers
        + 2 * b_tile * h_pad * 4                              # f32 h intermediate (+slack)
        + (in_features * h_pad + h_pad * num_classes
           + h_pad + num_classes) * itemsize                  # resident weights/biases
        + (4 << 20)                                           # headroom
    )
    vmem_limit = int(min(max(vmem_bytes, 16 << 20), 48 << 20))  # safe on v7x's 64 MiB

    cost = pl.CostEstimate(
        flops=2 * B * (in_features * h_pad + h_pad * num_classes),
        transcendentals=0,
        bytes_accessed=(x.size + w1_t.size + b1_2d.size + w2_t.size
                        + b2_2d.size + B * num_classes) * itemsize,
    )

    out = pl.pallas_call(
        _make_mlp_kernel(compute_dtype),
        out_shape=jax.ShapeDtypeStruct((B, num_classes), x.dtype),
        grid=(n_steps,),
        in_specs=[
            # Activations: one batch tile per grid step (ragged last block is
            # masked by Pallas; garbage rows only feed dropped output rows).
            pl.BlockSpec((b_tile, in_features), lambda i: (i, 0)),
            # Weights/biases: constant index_map -> VMEM-resident across steps.
            pl.BlockSpec((in_features, h_pad), lambda i: (0, 0)),
            pl.BlockSpec((1, h_pad), lambda i: (0, 0)),
            pl.BlockSpec((h_pad, num_classes), lambda i: (0, 0)),
            pl.BlockSpec((1, num_classes), lambda i: (0, 0)),
        ],
        # Unpadded output: last dim == full array extent (legal); masked vst
        # inside the kernel but minimal HBM write traffic, no wrapper slice.
        out_specs=pl.BlockSpec((b_tile, num_classes), lambda i: (i, 0)),
        compiler_params=pltpu.CompilerParams(
            dimension_semantics=("parallel",),   # v7x: shard batch over 2 TCs
            vmem_limit_bytes=vmem_limit,
        ),
        cost_estimate=cost,
    )(x, w1_t, b1_2d, w2_t, b2_2d)

    return out


def init_params(key, input_size, hidden_size, num_classes, dtype=jnp.float32):
    """Deterministic init mimicking torch.nn.Linear (uniform +/- 1/sqrt(fan_in))."""
    k1, k2, k3, k4 = jax.random.split(key, 4)
    bound1 = 1.0 / (input_size ** 0.5)
    bound2 = 1.0 / (hidden_size ** 0.5)
    # Stored already transposed: (in, out)
    w1_t = jax.random.uniform(k1, (input_size, hidden_size), dtype,
                              minval=-bound1, maxval=bound1)
    b1 = jax.random.uniform(k2, (hidden_size,), dtype,
                            minval=-bound1, maxval=bound1)
    w2_t = jax.random.uniform(k3, (hidden_size, num_classes), dtype,
                              minval=-bound2, maxval=bound2)
    b2 = jax.random.uniform(k4, (num_classes,), dtype,
                            minval=-bound2, maxval=bound2)
    return w1_t, b1, w2_t, b2


if __name__ == "__main__":
    # Small shapes consistent with the module: input=32, hidden=64, classes=16.
    # batch=200 with b_tile=64 exercises a multi-step grid (3 full tiles + one
    # ragged 8-row tile) with weights resident across all steps.
    batch, input_size, hidden_size, num_classes = 200, 32, 64, 16

    key = jax.random.PRNGKey(0)
    kx, kp = jax.random.split(key)
    x = jax.random.normal(kx, (batch, input_size), jnp.float32)
    w1_t, b1, w2_t, b2 = init_params(kp, input_size, hidden_size, num_classes)

    # f32 compute keeps exact parity with the torch/f32 reference.  Where that
    # parity can be relaxed, pass compute_dtype=jnp.bfloat16 on any generation
    # (bf16-native MXU on v5e/v6e/v7x) for the faster matmul path.
    out = multiple_parameters_forward(x, w1_t, b1, w2_t, b2, b_tile=64)
    out = jax.block_until_ready(out)

    # Pure-JAX reference check of the forward semantics (unpadded params).
    ref = jnp.maximum(x @ w1_t + b1, 0.0) @ w2_t + b2
    assert out.shape == (batch, num_classes)
    assert jnp.allclose(out, ref, atol=1e-5, rtol=1e-5), "mismatch vs reference"

    print("KERNEL_OK")
</pallas_src>

<mosaic_0001>
module attributes {stable_mosaic.version = 11 : i64} {
  func.func @_mlp_kernel(%arg0: i32, %arg1: memref<64x32xf32, #tpu.memory_space<vmem>>, %arg2: memref<32x128xf32, #tpu.memory_space<vmem>>, %arg3: memref<1x128xf32, #tpu.memory_space<vmem>>, %arg4: memref<128x16xf32, #tpu.memory_space<vmem>>, %arg5: memref<1x16xf32, #tpu.memory_space<vmem>>, %arg6: memref<64x16xf32, #tpu.memory_space<vmem>>) attributes {dimension_semantics = [#tpu.dimension_semantics<parallel>], iteration_bounds = array<i64: 4>, scalar_prefetch = 0 : i64, scratch_operands = 0 : i64, tpu.core_type = #tpu.core_type<tc>, window_params = [{transform_indices = @transform_0, window_bounds = array<i64: 64, 32>}, {pipeline_mode = #tpu.pipeline_mode<synchronous>, transform_indices = @transform_1, window_bounds = array<i64: 32, 128>}, {pipeline_mode = #tpu.pipeline_mode<synchronous>, transform_indices = @transform_2, window_bounds = array<i64: 1, 128>}, {pipeline_mode = #tpu.pipeline_mode<synchronous>, transform_indices = @transform_3, window_bounds = array<i64: 128, 16>}, {pipeline_mode = #tpu.pipeline_mode<synchronous>, transform_indices = @transform_4, window_bounds = array<i64: 1, 16>}, {transform_indices = @transform_5, window_bounds = array<i64: 64, 16>}]} {
    %c0 = arith.constant 0 : index
    %c0_0 = arith.constant 0 : index
    %0 = vector.load %arg1[%c0, %c0_0] : memref<64x32xf32, #tpu.memory_space<vmem>>, vector<64x32xf32>
    %c0_1 = arith.constant 0 : index
    %c0_2 = arith.constant 0 : index
    %1 = vector.load %arg2[%c0_1, %c0_2] : memref<32x128xf32, #tpu.memory_space<vmem>>, vector<32x128xf32>
    %c0_3 = arith.constant 0 : index
    %c0_4 = arith.constant 0 : index
    %2 = vector.load %arg4[%c0_3, %c0_4] : memref<128x16xf32, #tpu.memory_space<vmem>>, vector<128x16xf32>
    %cst = arith.constant dense<0.000000e+00> : vector<64x128xf32>
    %3 = tpu.matmul %0, %1, %cst {dimension_numbers = #tpu.dot_dimension_numbers<[1], [0], [0], [1], [0, 0, 1, 1], [], []>} : vector<64x32xf32>, vector<32x128xf32>, vector<64x128xf32> -> vector<64x128xf32>
    %c0_5 = arith.constant 0 : index
    %c0_6 = arith.constant 0 : index
    %4 = vector.load %arg3[%c0_5, %c0_6] : memref<1x128xf32, #tpu.memory_space<vmem>>, vector<1x128xf32>
    %5 = vector.broadcast %4 : vector<1x128xf32> to vector<64x128xf32>
    %6 = arith.addf %3, %5 : vector<64x128xf32>
    %cst_7 = arith.constant 0.000000e+00 : f32
    %7 = vector.broadcast %cst_7 : f32 to vector<64x128xf32>
    %8 = arith.maximumf %6, %7 : vector<64x128xf32>
    %cst_8 = arith.constant dense<0.000000e+00> : vector<64x16xf32>
    %9 = tpu.matmul %8, %2, %cst_8 {dimension_numbers = #tpu.dot_dimension_numbers<[1], [0], [0], [1], [0, 0, 1, 1], [], []>} : vector<64x128xf32>, vector<128x16xf32>, vector<64x16xf32> -> vector<64x16xf32>
    %c0_9 = arith.constant 0 : index
    %c0_10 = arith.constant 0 : index
    %10 = vector.load %arg5[%c0_9, %c0_10] : memref<1x16xf32, #tpu.memory_space<vmem>>, vector<1x16xf32>
    %11 = vector.broadcast %10 : vector<1x16xf32> to vector<64x16xf32>
    %12 = arith.addf %9, %11 : vector<64x16xf32>
    %c0_11 = arith.constant 0 : index
    %c0_12 = arith.constant 0 : index
    %13 = vector.load %arg6[%c0_11, %c0_12] : memref<64x16xf32, #tpu.memory_space<vmem>>, vector<64x16xf32>
    tpu.vector_store %arg6[%c0_11, %c0_12], %12 {strides = array<i32>} : memref<64x16xf32, #tpu.memory_space<vmem>>, vector<64x16xf32>,
    return
  }
  func.func @transform_0(%arg0: i32) -> (i32, i32) {
    %c0_i32 = arith.constant 0 : i32
    %c0_i32_0 = arith.constant 0 : i32
    return %arg0, %c0_i32 : i32, i32
  }
  func.func @transform_1(%arg0: i32) -> (i32, i32) {
    %c0_i32 = arith.constant 0 : i32
    %c0_i32_0 = arith.constant 0 : i32
    %c0_i32_1 = arith.constant 0 : i32
    return %c0_i32, %c0_i32_0 : i32, i32
  }
  func.func @transform_2(%arg0: i32) -> (i32, i32) {
    %c0_i32 = arith.constant 0 : i32
    %c0_i32_0 = arith.constant 0 : i32
    %c0_i32_1 = arith.constant 0 : i32
    return %c0_i32, %c0_i32_0 : i32, i32
  }
  func.func @transform_3(%arg0: i32) -> (i32, i32) {
    %c0_i32 = arith.constant 0 : i32
    %c0_i32_0 = arith.constant 0 : i32
    %c0_i32_1 = arith.constant 0 : i32
    return %c0_i32, %c0_i32_0 : i32, i32
  }
  func.func @transform_4(%arg0: i32) -> (i32, i32) {
    %c0_i32 = arith.constant 0 : i32
    %c0_i32_0 = arith.constant 0 : i32
    %c0_i32_1 = arith.constant 0 : i32
    return %c0_i32, %c0_i32_0 : i32, i32
  }
  func.func @transform_5(%arg0: i32) -> (i32, i32) {
    %c0_i32 = arith.constant 0 : i32
    %c0_i32_0 = arith.constant 0 : i32
    return %arg0, %c0_i32 : i32, i32
  }
}

</mosaic_0001>

<llo_original>
// kernel: multiple_parameters_forward.1
$region0: #{multiple_parameters_forward.1}
  #allocation0 [shape = 'u32[]', space=smem, size = 0x4, offset = 0x4, fixed_abs, tag = 'smem constant byte address 0x4 - core index']
  #allocation1 [shape = 'u32[144,128]{1,0:T(1,128)}', space=vmem, size = 0x12000, scoped, tag = 'internal scratch']
  %s0 = inlined_call_operand.vmem [shape: f32[200,32], index: 0, kind: input, shape index: {}]
  %s1 = inlined_call_operand.vmem [shape: f32[32,128], index: 1, kind: input, shape index: {}]
  %s2 = inlined_call_operand.vmem [shape: f32[1,128], index: 2, kind: input, shape index: {}]
  %s3 = inlined_call_operand.vmem [shape: f32[128,16], index: 3, kind: input, shape index: {}]
  %s4 = inlined_call_operand.vmem [shape: f32[1,16], index: 4, kind: input, shape index: {}]
  %s5 = inlined_call_operand.vmem [shape: f32[200,16], index: 5, kind: output, shape index: {}]
  %s6 = sld [smem:[#allocation0]]
  $region101: #{multiple_parameters_forward.1} parent=0
    _
  %s8 = ssub.s32 1, %s6
  %s9 = scalar_select 0, %s8, %s6
  $region1: #{multiple_parameters_forward.1} parent=0
    #allocation2 [shape = 'u8[65536]{0}', space=vmem, size = 0x10000, scoped, tag = 'output window, operand 0']
    loop: start=0, step=1, limit=6
    $region2: #{multiple_parameters_forward.1} parent=1 // loop_pre_header
      _
    $region3: #{multiple_parameters_forward.1} parent=1 // loop_header
      %s11 = sphi 0, %s15
      %p12 = scmp.ge.s32.totalorder %s11, 6
      %s21 = sphi 0, %s23
      %s24 = sphi 0, %s21
      %s25 = sphi 0, %s24
      %s41 = sphi 0, %s25
      %s45 = sphi 0, %s45
      %s47 = sphi 0, %s45
      %s48 = sphi 0, %s47
      %s62 = sphi 0, %s48
      %s66 = sphi 0, %s66
      %s68 = sphi 0, %s66
      %s69 = sphi 0, %s68
      %s83 = sphi 0, %s69
      %s87 = sphi 0, %s87
      %s89 = sphi 0, %s87
      %s90 = sphi 0, %s89
      %s104 = sphi 0, %s90
      %s108 = sphi 0, %s108
      %s110 = sphi 0, %s108
      %s111 = sphi 0, %s110
      %s125 = sphi 0, %s111
      %s131 = sphi 0, %s133
      %s134 = sphi 0, %s131
      %s135 = sphi 0, %s134
      %s151 = sphi 0, %s135
    $region4: #{multiple_parameters_forward.1} parent=1 // loop_header_branch
      %14 = sbr.rel (%p12) target = $region8
    $region5: #{multiple_parameters_forward.1} parent=1 // loop_body
      %s16 = ssub.s32 %s11, 1
      %s17 = ssub.s32 %s11, 2
      %s18 = sadd.s32 %s11, 1
      %s19 = ssub.s32 %s11, %s18
      %p20 = scmp.eq.s32.totalorder %s19, 0
      %s22 = sadd.s32 %s21, 1
      %s23 = scalar_select %p20, %s21, %s22
      %p26 = pneg %p20
      %p27 = scmp.eq.s32.totalorder %s11, 3
      %p28 = por %p26, %p27
      %p29 = scmp.ne.s32.totalorder %s21, %s24
      %p30 = scmp.eq.s32.totalorder %s11, 0
      %p31 = por %p29, %p30
      %p32 = scmp.ne.s32.totalorder %s21, %s24
      %p33 = scmp.eq.s32.totalorder %s16, 3
      %p34 = por %p32, %p33
      %p35 = scmp.ne.s32.totalorder %s24, %s25
      %p36 = scmp.eq.s32.totalorder %s16, 0
      %p37 = por %p35, %p36
      %p38 = scmp.ne.s32.totalorder %s24, %s25
      %p39 = scmp.eq.s32.totalorder %s17, 3
      %p40 = por %p38, %p39
      %p42 = scmp.ne.s32.totalorder %s25, %s41
      %p43 = scmp.eq.s32.totalorder %s17, 0
      %p44 = por %p42, %p43
      %s46 = sadd.s32 %s45, 1
      %p49 = scmp.eq.s32.totalorder %s11, 3
      %p50 = scmp.ne.s32.totalorder %s45, %s47
      %p51 = scmp.eq.s32.totalorder %s11, 0
      %p52 = por %p50, %p51
      %p53 = scmp.ne.s32.totalorder %s45, %s47
      %p54 = scmp.eq.s32.totalorder %s16, 3
      %p55 = por %p53, %p54
      %p56 = scmp.ne.s32.totalorder %s47, %s48
      %p57 = scmp.eq.s32.totalorder %s16, 0
      %p58 = por %p56, %p57
      %p59 = scmp.ne.s32.totalorder %s47, %s48
      %p60 = scmp.eq.s32.totalorder %s17, 3
      %p61 = por %p59, %p60
      %p63 = scmp.ne.s32.totalorder %s48, %s62
      %p64 = scmp.eq.s32.totalorder %s17, 0
      %p65 = por %p63, %p64
      %s67 = sadd.s32 %s66, 1
      %p70 = scmp.eq.s32.totalorder %s11, 3
      %p71 = scmp.ne.s32.totalorder %s66, %s68
      %p72 = scmp.eq.s32.totalorder %s11, 0
      %p73 = por %p71, %p72
      %p74 = scmp.ne.s32.totalorder %s66, %s68
      %p75 = scmp.eq.s32.totalorder %s16, 3
      %p76 = por %p74, %p75
      %p77 = scmp.ne.s32.totalorder %s68, %s69
      %p78 = scmp.eq.s32.totalorder %s16, 0
      %p79 = por %p77, %p78
      %p80 = scmp.ne.s32.totalorder %s68, %s69
      %p81 = scmp.eq.s32.totalorder %s17, 3
      %p82 = por %p80, %p81
      %p84 = scmp.ne.s32.totalorder %s69, %s83
      %p85 = scmp.eq.s32.totalorder %s17, 0
      %p86 = por %p84, %p85
      %s88 = sadd.s32 %s87, 1
      %p91 = scmp.eq.s32.totalorder %s11, 3
      %p92 = scmp.ne.s32.totalorder %s87, %s89
      %p93 = scmp.eq.s32.totalorder %s11, 0
      %p94 = por %p92, %p93
      %p95 = scmp.ne.s32.totalorder %s87, %s89
      %p96 = scmp.eq.s32.totalorder %s16, 3
      %p97 = por %p95, %p96
      %p98 = scmp.ne.s32.totalorder %s89, %s90
      %p99 = scmp.eq.s32.totalorder %s16, 0
      %p100 = por %p98, %p99
      %p101 = scmp.ne.s32.totalorder %s89, %s90
      %p102 = scmp.eq.s32.totalorder %s17, 3
      %p103 = por %p101, %p102
      %p105 = scmp.ne.s32.totalorder %s90, %s104
      %p106 = scmp.eq.s32.totalorder %s17, 0
      %p107 = por %p105, %p106
      %s109 = sadd.s32 %s108, 1
      %p112 = scmp.eq.s32.totalorder %s11, 3
      %p113 = scmp.ne.s32.totalorder %s108, %s110
      %p114 = scmp.eq.s32.totalorder %s11, 0
      %p115 = por %p113, %p114
      %p116 = scmp.ne.s32.totalorder %s108, %s110
      %p117 = scmp.eq.s32.totalorder %s16, 3
      %p118 = por %p116, %p117
      %p119 = scmp.ne.s32.totalorder %s110, %s111
      %p120 = scmp.eq.s32.totalorder %s16, 0
      %p121 = por %p119, %p120
      %p122 = scmp.ne.s32.totalorder %s110, %s111
      %p123 = scmp.eq.s32.totalorder %s17, 3
      %p124 = por %p122, %p123
      %p126 = scmp.ne.s32.totalorder %s111, %s125
      %p127 = scmp.eq.s32.totalorder %s17, 0
      %p128 = por %p126, %p127
      %s129 = ssub.s32 %s11, %s18
      %p130 = scmp.eq.s32.totalorder %s129, 0
      %s132 = sadd.s32 %s131, 1
      %s133 = scalar_select %p130, %s131, %s132
      %p136 = pneg %p130
      %p137 = scmp.eq.s32.totalorder %s11, 3
      %p138 = por %p136, %p137
      %p139 = scmp.ne.s32.totalorder %s131, %s134
      %p140 = scmp.eq.s32.totalorder %s11, 0
      %p141 = por %p139, %p140
      %p142 = scmp.ne.s32.totalorder %s131, %s134
      %p143 = scmp.eq.s32.totalorder %s16, 3
      %p144 = por %p142, %p143
      %p145 = scmp.ne.s32.totalorder %s134, %s135
      %p146 = scmp.eq.s32.totalorder %s16, 0
      %p147 = por %p145, %p146
      %p148 = scmp.ne.s32.totalorder %s134, %s135
      %p149 = scmp.eq.s32.totalorder %s17, 3
      %p150 = por %p148, %p149
      %p152 = scmp.ne.s32.totalorder %s135, %s151
      %p153 = scmp.eq.s32.totalorder %s17, 0
      %p154 = por %p152, %p153
      %p155 = scmp.le.s32.totalorder 1, %s11
      %p156 = scmp.lt.s32.totalorder %s11, 5
      %p157 = pnand %p155, %p156
      %p158 = pneg %p157
      // Predicated region
      $region9: #{multiple_parameters_forward.1} parent=5 // pred_check
        _
      $region10: #{multiple_parameters_forward.1} parent=5 // pred_check_branch
        %160 = sbr.rel (%p157) target = $region12
      $region11: #{multiple_parameters_forward.1} parent=5 // pred_region
        %s161 = ssub.s32 %s11, 1
        // Predicated region
        $region13: #{multiple_parameters_forward.1} parent=11 // pred_check
          %p162 = pneg %p58
        $region14: #{multiple_parameters_forward.1} parent=11 // pred_check_branch
          %164 = sbr.rel (%p162) target = $region16
        $region15: #{multiple_parameters_forward.1} parent=11 // pred_region
          _
        $region16: #{multiple_parameters_forward.1} parent=11 // pred_fallthru
          _
        // Predicated region
        $region17: #{multiple_parameters_forward.1} parent=11 // pred_check
          %p165 = pneg %p79
        $region18: #{multiple_parameters_forward.1} parent=11 // pred_check_branch
          %167 = sbr.rel (%p165) target = $region20
        $region19: #{multiple_parameters_forward.1} parent=11 // pred_region
          _
        $region20: #{multiple_parameters_forward.1} parent=11 // pred_fallthru
          _
        // Predicated region
        $region21: #{multiple_parameters_forward.1} parent=11 // pred_check
          %p168 = pneg %p100
        $region22: #{multiple_parameters_forward.1} parent=11 // pred_check_branch
          %170 = sbr.rel (%p168) target = $region24
        $region23: #{multiple_parameters_forward.1} parent=11 // pred_region
          _
        $region24: #{multiple_parameters_forward.1} parent=11 // pred_fallthru
          _
        // Predicated region
        $region25: #{multiple_parameters_forward.1} parent=11 // pred_check
          %p171 = pneg %p121
        $region26: #{multiple_parameters_forward.1} parent=11 // pred_check_branch
          %173 = sbr.rel (%p171) target = $region28
        $region27: #{multiple_parameters_forward.1} parent=11 // pred_region
          _
        $region28: #{multiple_parameters_forward.1} parent=11 // pred_fallthru
          _
      $region12: #{multiple_parameters_forward.1} parent=5 // pred_fallthru
        _
      %p174 = scmp.lt.s32.totalorder %s11, 4
      // Predicated region
      $region29: #{multiple_parameters_forward.1} parent=5 // pred_check
        %p175 = pneg %p174
      $region30: #{multiple_parameters_forward.1} parent=5 // pred_check_branch
        %177 = sbr.rel (%p175) target = $region32
      $region31: #{multiple_parameters_forward.1} parent=5 // pred_region
        // Predicated region
        $region33: #{multiple_parameters_forward.1} parent=31 // pred_check
          %p178 = pneg %p31
        $region34: #{multiple_parameters_forward.1} parent=31 // pred_check_branch
          %180 = sbr.rel (%p178) target = $region36
        $region35: #{multiple_parameters_forward.1} parent=31 // pred_region
          %s181 = smul.u32 8, %s11
          %s182 = ssub.s32 25, %s181
          %p183 = scmp.lt.s32.totalorder %s182, 8
          %s184 = scalar_select %p183, %s182, 8
          %s185 = smul.u32 128, %s184
          %p186 = scmp.lt.s32.totalorder %s181, 24
          %s187 = scalar_select %p186, %s181, 24
          %s188 = smul.addr %s187, 8
          %s189 = scalar_lea.vmem %s0, %s188
          %s190 = smul.u32 8, %s11
          %s191 = ssub.s32 25, %s190
          %p192 = scmp.lt.s32.totalorder %s191, 8
          %s193 = scalar_select %p192, %s191, 8
          %s194 = smul.u32 128, %s193
        $region36: #{multiple_parameters_forward.1} parent=31 // pred_fallthru
          _
      $region32: #{multiple_parameters_forward.1} parent=5 // pred_fallthru
        _
      %p195 = scmp.le.s32.totalorder 1, %s11
      %p196 = scmp.lt.s32.totalorder %s11, 5
      %p197 = pnand %p195, %p196
      %p198 = pneg %p197
      // Predicated region
      $region37: #{multiple_parameters_forward.1} parent=5 // pred_check
        _
      $region38: #{multiple_parameters_forward.1} parent=5 // pred_check_branch
        %200 = sbr.rel (%p197) target = $region40
      $region39: #{multiple_parameters_forward.1} parent=5 // pred_region
        %s201 = ssub.s32 %s11, 1
        %s202 = smul.u32 8, %s16
        %s203 = ssub.s32 25, %s202
        %p204 = scmp.lt.s32.totalorder %s203, 8
        %s205 = scalar_select %p204, %s203, 8
        %s206 = smul.u32 128, %s205
        %p207 = scmp.lt.s32.totalorder %s202, 24
        %s208 = scalar_select %p207, %s202, 24
        %s209 = smul.addr %s208, 8
        %s210 = scalar_lea.vmem %s0, %s209
        %p211 = pneg %p37
        %p212 = pneg %p34
        %p213 = pneg %p58
        %p214 = pneg %p55
        %p215 = pneg %p79
        %p216 = pneg %p76
        %p217 = pneg %p100
        %p218 = pneg %p97
        %p219 = pneg %p121
        %p220 = pneg %p118
        %p221 = pneg %p147
        %p222 = pneg %p144
        %s223 = sand.u32 %s134, 1
        %s224 = sand.u32 %s134, 1
        %s225 = smul.addr %s224, 64
        %s226 = scalar_lea.vmem [#allocation2], %s225
        %s227 = smul.u32 8, %s16
        %s228 = ssub.s32 25, %s227
        %p229 = scmp.lt.s32.totalorder %s228, 8
        %s230 = scalar_select %p229, %s228, 8
        %s231 = smul.u32 128, %s230
        %p232 = scmp.lt.s32.totalorder %s227, 24
        %s233 = scalar_select %p232, %s227, 24
        %s234 = smul.addr %s233, 8
        %s235 = scalar_lea.vmem %s0, %s234
        %s236 = smul.u32 8, %s16
        %s237 = ssub.s32 25, %s236
        %p238 = scmp.lt.s32.totalorder %s237, 8
        %s239 = scalar_select %p238, %s237, 8
        %s240 = smul.u32 128, %s239
        %s241 = smul.u32 8, %s16
        %s242 = ssub.s32 25, %s241
        %p243 = scmp.lt.s32.totalorder %s242, 8
        %s244 = scalar_select %p243, %s242, 8
        %s245 = smul.u32 128, %s244
        %v246 = vld [vmem:[%s235] sm:$0xff]
        %v247 = vld [vmem:[%s235 + $0x8] sm:$0xff]
        %v248 = vld [vmem:[%s235 + $0x10] sm:$0xff]
        %v249 = vld [vmem:[%s235 + $0x18] sm:$0xff]
        %v250 = vld [vmem:[%s235 + $0x20] sm:$0xff]
        %v251 = vld [vmem:[%s235 + $0x28] sm:$0xff]
        %v252 = vld [vmem:[%s235 + $0x30] sm:$0xff]
        %v253 = vld [vmem:[%s235 + $0x38] sm:$0xff]
        %v254 = vld [vmem:[%s1] sm:$0xff]
        %v255 = vld [vmem:[%s1 + $0x8] sm:$0xff]
        %v256 = vld [vmem:[%s1 + $0x10] sm:$0xff]
        %v257 = vld [vmem:[%s1 + $0x18] sm:$0xff]
        %v258 = vld [vmem:[%s3] sm:$0xff]
        %v259 = vld [vmem:[%s3 + $0x8] sm:$0xff]
        %v260 = vld [vmem:[%s3 + $0x10] sm:$0xff]
        %v261 = vld [vmem:[%s3 + $0x18] sm:$0xff]
        %v262 = vld [vmem:[%s3 + $0x20] sm:$0xff]
        %v263 = vld [vmem:[%s3 + $0x28] sm:$0xff]
        %v264 = vld [vmem:[%s3 + $0x30] sm:$0xff]
        %v265 = vld [vmem:[%s3 + $0x38] sm:$0xff]
        %v266 = vld [vmem:[%s3 + $0x40] sm:$0xff]
        %v267 = vld [vmem:[%s3 + $0x48] sm:$0xff]
        %v268 = vld [vmem:[%s3 + $0x50] sm:$0xff]
        %v269 = vld [vmem:[%s3 + $0x58] sm:$0xff]
        %v270 = vld [vmem:[%s3 + $0x60] sm:$0xff]
        %v271 = vld [vmem:[%s3 + $0x68] sm:$0xff]
        %v272 = vld [vmem:[%s3 + $0x70] sm:$0xff]
        %v273 = vld [vmem:[%s3 + $0x78] sm:$0xff]
        %v274 = vld [vmem:[%s2] sm:$0x1]
        %v276 = vlaneseq
        %v277 = vshrl.u32 %v276, 7
        %v278 = vsub.s32 0, %v277
        %v279 = vrot.slane %v274, %v278
        %vm281 = vcmask 261120
        %v283 = vsel %vm281, %v246, 0
        %v286 = vsel %vm281, %v247, 0
        %v289 = vsel %vm281, %v248, 0
        %v292 = vsel %vm281, %v249, 0
        %v295 = vsel %vm281, %v250, 0
        %v298 = vsel %vm281, %v251, 0
        %v301 = vsel %vm281, %v252, 0
        %v304 = vsel %vm281, %v253, 0
        %306 = vmatprep.subr.mxu0 0.0
        %307 = vmatpush1.msra.mxu0 0.0
        %308 = vmatprep.subr.mxu0 0.0
        %309 = vmatpush1.msra.mxu0 0.0
        %310 = vmatprep.subr.mxu0 0.0
        %311 = vmatpush1.msra.mxu0 0.0
        %312 = vmatprep.subr.mxu0 0.0
        %313 = vmatpush1.msra.mxu0 0.0
        %314 = vmatprep.subr.mxu0 0.0
        %315 = vmatpush1.msra.mxu0 0.0
        %316 = vmatprep.subr.mxu0 0.0
        %317 = vmatpush1.msra.mxu0 0.0
        %318 = vmatprep.subr.mxu0 0.0
        %319 = vmatpush1.msra.mxu0 0.0
        %320 = vmatprep.subr.mxu0 0.0
        %321 = vmatpush1.msra.mxu0 0.0
        %322 = vmatprep.subr.mxu0 0.0
        %323 = vmatpush1.msra.mxu0 0.0
        %324 = vmatprep.subr.mxu0 0.0
        %325 = vmatpush1.msra.mxu0 0.0
        %326 = vmatprep.subr.mxu0 0.0
        %327 = vmatpush1.msra.mxu0 0.0
        %328 = vmatprep.subr.mxu0 0.0
        %329 = vmatpush1.msra.mxu0 0.0
        %330 = vmatprep.subr.mxu0 0.0
        %331 = vmatpush1.msra.mxu0 %v257
        %332 = vmatprep.subr.mxu0 0.0
        %333 = vmatpush1.msra.mxu0 %v256
        %334 = vmatprep.subr.mxu0 0.0
        %335 = vmatpush1.msra.mxu0 %v255
        %336 = vmatprep.subr.mxu0 0.0
        %337 = vmatpush1.msra.mxu0 %v254
        %338 = vmatprep.subr.mxu0 0.0
        %339 = vmatpush2.msra.mxu0 0.0
        %340 = vmatprep.subr.mxu0 0.0
        %341 = vmatpush2.msra.mxu0 0.0
        %342 = vmatprep.subr.mxu0 0.0
        %343 = vmatpush2.msra.mxu0 0.0
        %344 = vmatprep.subr.mxu0 0.0
        %345 = vmatpush2.msra.mxu0 0.0
        %346 = vmatprep.subr.mxu0 0.0
        %347 = vmatpush2.msra.mxu0 0.0
        %348 = vmatprep.subr.mxu0 0.0
        %349 = vmatpush2.msra.mxu0 0.0
        %350 = vmatprep.subr.mxu0 0.0
        %351 = vmatpush2.msra.mxu0 0.0
        %352 = vmatprep.subr.mxu0 0.0
        %353 = vmatpush2.msra.mxu0 0.0
        %354 = vmatprep.subr.mxu0 0.0
        %355 = vmatpush2.msra.mxu0 0.0
        %356 = vmatprep.subr.mxu0 0.0
        %357 = vmatpush2.msra.mxu0 0.0
        %358 = vmatprep.subr.mxu0 0.0
        %359 = vmatpush2.msra.mxu0 0.0
        %360 = vmatprep.subr.mxu0 0.0
        %361 = vmatpush2.msra.mxu0 0.0
        %362 = vmatprep.subr.mxu0 0.0
        %363 = vmatpush2.msra.mxu0 0.0
        %364 = vmatprep.subr.mxu0 0.0
        %365 = vmatpush2.msra.mxu0 0.0
        %366 = vmatprep.subr.mxu0 0.0
        %367 = vmatpush2.msra.mxu0 0.0
        %368 = vmatprep.subr.mxu0 0.0
        %369 = vmatpush2.msra.mxu0 0.0
        %370 = vmatprep.mubr.f32.mxu0 0.0
        %371 = vmatmul.mubr.f32.gmra.mxu0 %v283
        %v372 = vpop.f32.mrf.mxu0
        %v373 = vadd.f32 %v279, %v372
        %v374 = vpop.f32.mrf.mxu0
        %375 = vmatprep.mubr.f32.mxu0 0.0
        %376 = vmatmul.mubr.f32.gmra.mxu0 %v286
        %v377 = vpop.f32.mrf.mxu0
        %v378 = vadd.f32 %v279, %v377
        %v379 = vpop.f32.mrf.mxu0
        %380 = vmatprep.mubr.f32.mxu0 0.0
        %381 = vmatmul.mubr.f32.gmra.mxu0 %v289
        %v382 = vpop.f32.mrf.mxu0
        %v383 = vadd.f32 %v279, %v382
        %v384 = vpop.f32.mrf.mxu0
        %385 = vmatprep.mubr.f32.mxu0 0.0
        %386 = vmatmul.mubr.f32.gmra.mxu0 %v292
        %v387 = vpop.f32.mrf.mxu0
        %v388 = vadd.f32 %v279, %v387
        %v389 = vpop.f32.mrf.mxu0
        %390 = vmatprep.mubr.f32.mxu0 0.0
        %391 = vmatmul.mubr.f32.gmra.mxu0 %v295
        %v392 = vpop.f32.mrf.mxu0
        %v393 = vadd.f32 %v279, %v392
        %v394 = vpop.f32.mrf.mxu0
        %395 = vmatprep.mubr.f32.mxu0 0.0
        %396 = vmatmul.mubr.f32.gmra.mxu0 %v298
        %v397 = vpop.f32.mrf.mxu0
        %v398 = vadd.f32 %v279, %v397
        %v399 = vpop.f32.mrf.mxu0
        %400 = vmatprep.mubr.f32.mxu0 0.0
        %401 = vmatmul.mubr.f32.gmra.mxu0 %v301
        %v402 = vpop.f32.mrf.mxu0
        %v403 = vadd.f32 %v279, %v402
        %v404 = vpop.f32.mrf.mxu0
        %405 = vmatprep.mubr.f32.mxu0 0.0
        %406 = vmatmul.mubr.f32.gmra.mxu0 %v304
        %v407 = vpop.f32.mrf.mxu0
        %v408 = vadd.f32 %v279, %v407
        %v409 = vpop.f32.mrf.mxu0
        %410 = vdwg.mxu0
        %v411 = vmax.f32 %v373, 0.0
        %v412 = vmax.f32 %v378, 0.0
        %v413 = vmax.f32 %v383, 0.0
        %v414 = vmax.f32 %v388, 0.0
        %v415 = vmax.f32 %v393, 0.0
        %v416 = vmax.f32 %v398, 0.0
        %v417 = vmax.f32 %v403, 0.0
        %v418 = vmax.f32 %v408, 0.0
        %v419 = vld [vmem:[%s4] sm:$0x1]
        %v421 = vlaneseq
        %v422 = vshrl.u32 %v421, 7
        %v423 = vsub.s32 0, %v422
        %v424 = vrot.slane %v419, %v423
        %426 = vmatprep.subr.mxu0 0.0
        %427 = vmatpush1.msra.mxu0 %v273
        %428 = vmatprep.subr.mxu0 0.0
        %429 = vmatpush1.msra.mxu0 %v272
        %430 = vmatprep.subr.mxu0 0.0
        %431 = vmatpush1.msra.mxu0 %v271
        %432 = vmatprep.subr.mxu0 0.0
        %433 = vmatpush1.msra.mxu0 %v270
        %434 = vmatprep.subr.mxu0 0.0
        %435 = vmatpush1.msra.mxu0 %v269
        %436 = vmatprep.subr.mxu0 0.0
        %437 = vmatpush1.msra.mxu0 %v268
        %438 = vmatprep.subr.mxu0 0.0
        %439 = vmatpush1.msra.mxu0 %v267
        %440 = vmatprep.subr.mxu0 0.0
        %441 = vmatpush1.msra.mxu0 %v266
        %442 = vmatprep.subr.mxu0 0.0
        %443 = vmatpush1.msra.mxu0 %v265
        %444 = vmatprep.subr.mxu0 0.0
        %445 = vmatpush1.msra.mxu0 %v264
        %446 = vmatprep.subr.mxu0 0.0
        %447 = vmatpush1.msra.mxu0 %v263
        %448 = vmatprep.subr.mxu0 0.0
        %449 = vmatpush1.msra.mxu0 %v262
        %450 = vmatprep.subr.mxu0 0.0
        %451 = vmatpush1.msra.mxu0 %v261
        %452 = vmatprep.subr.mxu0 0.0
        %453 = vmatpush1.msra.mxu0 %v260
        %454 = vmatprep.subr.mxu0 0.0
        %455 = vmatpush1.msra.mxu0 %v259
        %456 = vmatprep.subr.mxu0 0.0
        %457 = vmatpush1.msra.mxu0 %v258
        %458 = vmatprep.subr.mxu0 0.0
        %459 = vmatpush2.msra.mxu0 0.0
        %460 = vmatprep.subr.mxu0 0.0
        %461 = vmatpush2.msra.mxu0 0.0
        %462 = vmatprep.subr.mxu0 0.0
        %463 = vmatpush2.msra.mxu0 0.0
        %464 = vmatprep.subr.mxu0 0.0
        %465 = vmatpush2.msra.mxu0 0.0
        %466 = vmatprep.subr.mxu0 0.0
        %467 = vmatpush2.msra.mxu0 0.0
        %468 = vmatprep.subr.mxu0 0.0
        %469 = vmatpush2.msra.mxu0 0.0
        %470 = vmatprep.subr.mxu0 0.0
        %471 = vmatpush2.msra.mxu0 0.0
        %472 = vmatprep.subr.mxu0 0.0
        %473 = vmatpush2.msra.mxu0 0.0
        %474 = vmatprep.subr.mxu0 0.0
        %475 = vmatpush2.msra.mxu0 0.0
        %476 = vmatprep.subr.mxu0 0.0
        %477 = vmatpush2.msra.mxu0 0.0
        %478 = vmatprep.subr.mxu0 0.0
        %479 = vmatpush2.msra.mxu0 0.0
        %480 = vmatprep.subr.mxu0 0.0
        %481 = vmatpush2.msra.mxu0 0.0
        %482 = vmatprep.subr.mxu0 0.0
        %483 = vmatpush2.msra.mxu0 0.0
        %484 = vmatprep.subr.mxu0 0.0
        %485 = vmatpush2.msra.mxu0 0.0
        %486 = vmatprep.subr.mxu0 0.0
        %487 = vmatpush2.msra.mxu0 0.0
        %488 = vmatprep.subr.mxu0 0.0
        %489 = vmatpush2.msra.mxu0 0.0
        %490 = vmatprep.mubr.f32.mxu0 0.0
        %491 = vmatmul.mubr.f32.gmra.mxu0 %v411
        %v492 = vpop.f32.mrf.mxu0
        %v493 = vadd.f32 %v424, %v492
        %v494 = vpop.f32.mrf.mxu0
        %495 = vmatprep.mubr.f32.mxu0 0.0
        %496 = vmatmul.mubr.f32.gmra.mxu0 %v412
        %v497 = vpop.f32.mrf.mxu0
        %v498 = vadd.f32 %v424, %v497
        %v499 = vpop.f32.mrf.mxu0
        %500 = vmatprep.mubr.f32.mxu0 0.0
        %501 = vmatmul.mubr.f32.gmra.mxu0 %v413
        %v502 = vpop.f32.mrf.mxu0
        %v503 = vadd.f32 %v424, %v502
        %v504 = vpop.f32.mrf.mxu0
        %505 = vmatprep.mubr.f32.mxu0 0.0
        %506 = vmatmul.mubr.f32.gmra.mxu0 %v414
        %v507 = vpop.f32.mrf.mxu0
        %v508 = vadd.f32 %v424, %v507
        %v509 = vpop.f32.mrf.mxu0
        %510 = vmatprep.mubr.f32.mxu0 0.0
        %511 = vmatmul.mubr.f32.gmra.mxu0 %v415
        %v512 = vpop.f32.mrf.mxu0
        %v513 = vadd.f32 %v424, %v512
        %v514 = vpop.f32.mrf.mxu0
        %515 = vmatprep.mubr.f32.mxu0 0.0
        %516 = vmatmul.mubr.f32.gmra.mxu0 %v416
        %v517 = vpop.f32.mrf.mxu0
        %v518 = vadd.f32 %v424, %v517
        %v519 = vpop.f32.mrf.mxu0
        %520 = vmatprep.mubr.f32.mxu0 0.0
        %521 = vmatmul.mubr.f32.gmra.mxu0 %v417
        %v522 = vpop.f32.mrf.mxu0
        %v523 = vadd.f32 %v424, %v522
        %v524 = vpop.f32.mrf.mxu0
        %525 = vmatprep.mubr.f32.mxu0 0.0
        %526 = vmatmul.mubr.f32.gmra.mxu0 %v418
        %v527 = vpop.f32.mrf.mxu0
        %v528 = vadd.f32 %v424, %v527
        %v529 = vpop.f32.mrf.mxu0
        %530 = vdwg.mxu0
        %vm531 = vcmask 130048
        %532 = vst.msk [vmem:[%s226] sm:$0xff] %vm531, %v493
        %533 = vst.msk [vmem:[%s226 + $0x8] sm:$0xff] %vm531, %v498
        %534 = vst.msk [vmem:[%s226 + $0x10] sm:$0xff] %vm531, %v503
        %535 = vst.msk [vmem:[%s226 + $0x18] sm:$0xff] %vm531, %v508
        %536 = vst.msk [vmem:[%s226 + $0x20] sm:$0xff] %vm531, %v513
        %537 = vst.msk [vmem:[%s226 + $0x28] sm:$0xff] %vm531, %v518
        %538 = vst.msk [vmem:[%s226 + $0x30] sm:$0xff] %vm531, %v523
        %539 = vst.msk [vmem:[%s226 + $0x38] sm:$0xff] %vm531, %v528
        %s540 = sand.u32 %s134, 1
        %s541 = sand.u32 %s134, 1
        %s542 = smul.addr %s541, 64
        %s543 = scalar_lea.vmem [#allocation2], %s542
        // Predicated region
        $region41: #{multiple_parameters_forward.1} parent=39 // pred_check
          %p544 = pneg %p144
        $region42: #{multiple_parameters_forward.1} parent=39 // pred_check_branch
          %546 = sbr.rel (%p544) target = $region44
        $region43: #{multiple_parameters_forward.1} parent=39 // pred_region
          %s547 = smul.u32 8, %s16
          %s548 = ssub.s32 25, %s547
          %p549 = scmp.lt.s32.totalorder %s548, 8
          %s550 = scalar_select %p549, %s548, 8
          %s551 = smul.u32 128, %s550
          %p552 = scmp.ne.s32.totalorder 0, %s551
          %s553 = smul.addr %s547, 8
          %s554 = scalar_lea.vmem %s5, %s553
          // Predicated region
          $region45: #{multiple_parameters_forward.1} parent=43 // pred_check
            %p555 = pneg %p552
          $region46: #{multiple_parameters_forward.1} parent=43 // pred_check_branch
            %557 = sbr.rel (%p555) target = $region48
          $region47: #{multiple_parameters_forward.1} parent=43 // pred_region
            // Predicated region
            $region49: #{multiple_parameters_forward.1} parent=47 // pred_check
              _
            $region50: #{multiple_parameters_forward.1} parent=47 // pred_check_branch
              %559 = sbr.rel (0) target = $region52
            $region51: #{multiple_parameters_forward.1} parent=47 // pred_region
              // Predicated region
              $region71: #{multiple_parameters_forward.1} parent=51 // pred_check
                _
              $region72: #{multiple_parameters_forward.1} parent=51 // pred_check_branch
                %623 = sbr.rel (0) target = $region74
              $region73: #{multiple_parameters_forward.1} parent=51 // pred_region
                %s624 = sshrl.u32 %s550, 3
                // While loop
                $region75: #{multiple_parameters_forward.1} parent=73 // loop_pre_header
                  _
                $region76: #{multiple_parameters_forward.1} parent=73 // loop_header
                  %s626 = sphi 0, %s628
                  %p627 = scmp.ge.s32.totalorder %s626, %s624
                  %s631 = sphi 0, %s652
                  %s632 = sphi %s543, %s655
                  %s633 = sphi %s554, %s656
                $region77: #{multiple_parameters_forward.1} parent=73 // loop_header_branch
                  %630 = sbr.rel (%p627) target = $region81
                $region78: #{multiple_parameters_forward.1} parent=73 // loop_body
                  %v634 = vld [vmem:[%s632] sm:$0xff]
                  %635 = vst [vmem:[%s633] sm:$0xff] %v634
                  %v636 = vld [vmem:[%s632 + $0x8] sm:$0xff]
                  %637 = vst [vmem:[%s633 + $0x8] sm:$0xff] %v636
                  %v638 = vld [vmem:[%s632 + $0x10] sm:$0xff]
                  %639 = vst [vmem:[%s633 + $0x10] sm:$0xff] %v638
                  %v640 = vld [vmem:[%s632 + $0x18] sm:$0xff]
                  %641 = vst [vmem:[%s633 + $0x18] sm:$0xff] %v640
                  %v642 = vld [vmem:[%s632 + $0x20] sm:$0xff]
                  %643 = vst [vmem:[%s633 + $0x20] sm:$0xff] %v642
                  %v644 = vld [vmem:[%s632 + $0x28] sm:$0xff]
                  %645 = vst [vmem:[%s633 + $0x28] sm:$0xff] %v644
                  %v646 = vld [vmem:[%s632 + $0x30] sm:$0xff]
                  %647 = vst [vmem:[%s633 + $0x30] sm:$0xff] %v646
                  %v648 = vld [vmem:[%s632 + $0x38] sm:$0xff]
                  %649 = vst [vmem:[%s633 + $0x38] sm:$0xff] %v648
                  %s650 = sadd.s32 1, %s631
                  %p651 = scmp.ge.s32.totalorder %s650, %s624
                  %s652 = scalar_select %p651, 0, %s650
                  %s653 = smul.u32 %s652, 64
                  %s654 = smul.u32 %s652, 64
                  %s655 = scalar_lea.vmem %s543, %s653 [#allocation2]
                  %s656 = scalar_lea.vmem %s554, %s654
                $region79: #{multiple_parameters_forward.1} parent=73 // loop_footer
                  %s628 = sadd.s32 %s626, 1
                $region80: #{multiple_parameters_forward.1} parent=73 // loop_footer_branch
                  %625 = sbr.rel target = $region76
                $region81: #{multiple_parameters_forward.1} parent=73 // loop_exit
                  _
                %s657 = sshrl.u32 %s550, 3
                %s658 = sand.u32 %s550, 7
                %s659 = smul.u32 %s657, 8
                %s660 = smul.u32 8, %s659
                %s661 = scalar_lea.vmem %s543, %s660 [#allocation2]
                %s662 = smul.u32 8, %s659
                %s663 = scalar_lea.vmem %s554, %s662
                // While loop
                $region82: #{multiple_parameters_forward.1} parent=73 // loop_pre_header
                  _
                $region83: #{multiple_parameters_forward.1} parent=73 // loop_header
                  %s665 = sphi 0, %s667
                  %p666 = scmp.ge.s32.totalorder %s665, %s658
                  %s670 = sphi 0, %s677
                  %s671 = sphi %s661, %s680
                  %s672 = sphi %s663, %s681
                $region84: #{multiple_parameters_forward.1} parent=73 // loop_header_branch
                  %669 = sbr.rel (%p666) target = $region88
                $region85: #{multiple_parameters_forward.1} parent=73 // loop_body
                  %v673 = vld [vmem:[%s671] sm:$0xff]
                  %674 = vst [vmem:[%s672] sm:$0xff] %v673
                  %s675 = sadd.s32 1, %s670
                  %p676 = scmp.ge.s32.totalorder %s675, %s658
                  %s677 = scalar_select %p676, 0, %s675
                  %s678 = smul.u32 %s677, 8
                  %s679 = smul.u32 %s677, 8
                  %s680 = scalar_lea.vmem %s661, %s678 [#allocation2]
                  %s681 = scalar_lea.vmem %s663, %s679
                $region86: #{multiple_parameters_forward.1} parent=73 // loop_footer
                  %s667 = sadd.s32 %s665, 1
                $region87: #{multiple_parameters_forward.1} parent=73 // loop_footer_branch
                  %664 = sbr.rel target = $region83
                $region88: #{multiple_parameters_forward.1} parent=73 // loop_exit
                  _
              $region74: #{multiple_parameters_forward.1} parent=51 // pred_fallthru
                _
              // Predicated region
              $region89: #{multiple_parameters_forward.1} parent=51 // pred_check
                _
              $region90: #{multiple_parameters_forward.1} parent=51 // pred_check_branch
                %683 = sbr.rel target = $region92
              $region91: #{multiple_parameters_forward.1} parent=51 // pred_region
                _
              $region92: #{multiple_parameters_forward.1} parent=51 // pred_fallthru
                _
            $region52: #{multiple_parameters_forward.1} parent=47 // pred_fallthru
              _
            // Predicated region
            $region53: #{multiple_parameters_forward.1} parent=47 // pred_check
              _
            $region54: #{multiple_parameters_forward.1} parent=47 // pred_check_branch
              %561 = sbr.rel target = $region56
            $region55: #{multiple_parameters_forward.1} parent=47 // pred_region
              %s563 = ssub.s32 256, 1
              %s564 = sshrl.u32 %s550, 3
              // While loop
              $region57: #{multiple_parameters_forward.1} parent=55 // loop_pre_header
                _
              $region58: #{multiple_parameters_forward.1} parent=55 // loop_header
                %s566 = sphi 0, %s568
                %p567 = scmp.ge.s32.totalorder %s566, %s564
                %s571 = sphi 0, %s592
                %s572 = sphi %s543, %s595
                %s573 = sphi %s554, %s596
              $region59: #{multiple_parameters_forward.1} parent=55 // loop_header_branch
                %570 = sbr.rel (%p567) target = $region63
              $region60: #{multiple_parameters_forward.1} parent=55 // loop_body
                %v574 = vld [vmem:[%s572] sm:%s563]
                %575 = vst [vmem:[%s573] sm:%s563] %v574
                %v576 = vld [vmem:[%s572 + $0x8] sm:%s563]
                %577 = vst [vmem:[%s573 + $0x8] sm:%s563] %v576
                %v578 = vld [vmem:[%s572 + $0x10] sm:%s563]
                %579 = vst [vmem:[%s573 + $0x10] sm:%s563] %v578
                %v580 = vld [vmem:[%s572 + $0x18] sm:%s563]
                %581 = vst [vmem:[%s573 + $0x18] sm:%s563] %v580
                %v582 = vld [vmem:[%s572 + $0x20] sm:%s563]
                %583 = vst [vmem:[%s573 + $0x20] sm:%s563] %v582
                %v584 = vld [vmem:[%s572 + $0x28] sm:%s563]
                %585 = vst [vmem:[%s573 + $0x28] sm:%s563] %v584
                %v586 = vld [vmem:[%s572 + $0x30] sm:%s563]
                %587 = vst [vmem:[%s573 + $0x30] sm:%s563] %v586
                %v588 = vld [vmem:[%s572 + $0x38] sm:%s563]
                %589 = vst [vmem:[%s573 + $0x38] sm:%s563] %v588
                %s590 = sadd.s32 1, %s571
                %p591 = scmp.ge.s32.totalorder %s590, %s564
                %s592 = scalar_select %p591, 0, %s590
                %s593 = smul.u32 %s592, 64
                %s594 = smul.u32 %s592, 64
                %s595 = scalar_lea.vmem %s543, %s593 [#allocation2]
                %s596 = scalar_lea.vmem %s554, %s594
              $region61: #{multiple_parameters_forward.1} parent=55 // loop_footer
                %s568 = sadd.s32 %s566, 1
              $region62: #{multiple_parameters_forward.1} parent=55 // loop_footer_branch
                %565 = sbr.rel target = $region58
              $region63: #{multiple_parameters_forward.1} parent=55 // loop_exit
                _
              %s597 = sshrl.u32 %s550, 3
              %s598 = sand.u32 %s550, 7
              %s599 = smul.u32 %s597, 8
              %s600 = smul.u32 8, %s599
              %s601 = scalar_lea.vmem %s543, %s600 [#allocation2]
              %s602 = smul.u32 8, %s599
              %s603 = scalar_lea.vmem %s554, %s602
              // While loop
              $region64: #{multiple_parameters_forward.1} parent=55 // loop_pre_header
                _
              $region65: #{multiple_parameters_forward.1} parent=55 // loop_header
                %s605 = sphi 0, %s607
                %p606 = scmp.ge.s32.totalorder %s605, %s598
                %s610 = sphi 0, %s617
                %s611 = sphi %s601, %s620
                %s612 = sphi %s603, %s621
              $region66: #{multiple_parameters_forward.1} parent=55 // loop_header_branch
                %609 = sbr.rel (%p606) target = $region70
              $region67: #{multiple_parameters_forward.1} parent=55 // loop_body
                %v613 = vld [vmem:[%s611] sm:%s563]
                %614 = vst [vmem:[%s612] sm:%s563] %v613
                %s615 = sadd.s32 1, %s610
                %p616 = scmp.ge.s32.totalorder %s615, %s598
                %s617 = scalar_select %p616, 0, %s615
                %s618 = smul.u32 %s617, 8
                %s619 = smul.u32 %s617, 8
                %s620 = scalar_lea.vmem %s601, %s618 [#allocation2]
                %s621 = scalar_lea.vmem %s603, %s619
              $region68: #{multiple_parameters_forward.1} parent=55 // loop_footer
                %s607 = sadd.s32 %s605, 1
              $region69: #{multiple_parameters_forward.1} parent=55 // loop_footer_branch
                %604 = sbr.rel target = $region65
              $region70: #{multiple_parameters_forward.1} parent=55 // loop_exit
                _
            $region56: #{multiple_parameters_forward.1} parent=47 // pred_fallthru
              _
          $region48: #{multiple_parameters_forward.1} parent=43 // pred_fallthru
            _
          %684 = vnop
        $region44: #{multiple_parameters_forward.1} parent=39 // pred_fallthru
          _
      $region40: #{multiple_parameters_forward.1} parent=5 // pred_fallthru
        _
      %p685 = scmp.le.s32.totalorder 2, %s11
      // Predicated region
      $region93: #{multiple_parameters_forward.1} parent=5 // pred_check
        %p686 = pneg %p685
      $region94: #{multiple_parameters_forward.1} parent=5 // pred_check_branch
        %688 = sbr.rel (%p686) target = $region96
      $region95: #{multiple_parameters_forward.1} parent=5 // pred_region
        %s689 = ssub.s32 %s11, 2
        // Predicated region
        $region97: #{multiple_parameters_forward.1} parent=95 // pred_check
          %p690 = pneg %p150
        $region98: #{multiple_parameters_forward.1} parent=95 // pred_check_branch
          %692 = sbr.rel (%p690) target = $region100
        $region99: #{multiple_parameters_forward.1} parent=95 // pred_region
          %s693 = sand.u32 %s135, 1
          %s694 = sand.u32 %s135, 1
          %s695 = smul.addr %s694, 64
          %s696 = scalar_lea.vmem [#allocation2], %s695
        $region100: #{multiple_parameters_forward.1} parent=95 // pred_fallthru
          _
      $region96: #{multiple_parameters_forward.1} parent=5 // pred_fallthru
        _
    $region6: #{multiple_parameters_forward.1} parent=1 // loop_footer
      %s15 = sadd.s32 1, %s11
    $region7: #{multiple_parameters_forward.1} parent=1 // loop_footer_branch
      %10 = sbr.rel target = $region3
    $region8: #{multiple_parameters_forward.1} parent=1 // loop_exit
      _

</llo_original>
